<compile_context>
chip_gen: v7x
topology: tpu7x:2x2x1
jax: 0.10.0
libtpu: 0.0.40
codegen_flags: <defaults>
</compile_context>

<pallas_src>
import functools

import jax
import jax.numpy as jnp
from jax import lax
from jax.experimental import pallas as pl
from jax.experimental.pallas import tpu as pltpu


def _online_triplet_loss_kernel(x_ref, lcol_ref, lrow_ref, loss_ref, count_ref,
                                *, margin):
    x = x_ref[...].astype(jnp.float32)          # (N, E) embeddings
    lcol = lcol_ref[...]                        # (N, 1) int32 labels
    lrow = lrow_ref[...]                        # (1, N) int32 labels
    n = x.shape[0]

    # Gram matrix on the MXU (HIGHEST precision keeps f32 accuracy; at scale
    # cast inputs to bf16 with f32 accumulation instead).
    g = lax.dot_general(x, x, (((1,), (1,)), ((), ())),
                        preferred_element_type=jnp.float32,
                        precision=lax.Precision.HIGHEST)          # (N, N)

    row_i = lax.broadcasted_iota(jnp.int32, (n, n), 0)
    col_j = lax.broadcasted_iota(jnp.int32, (n, n), 1)
    eye = (row_i == col_j).astype(jnp.float32)

    # ||x_i||^2 from the Gram diagonal, in both layouts (no transpose needed).
    sq_col = jnp.sum(g * eye, axis=1, keepdims=True)              # (N, 1)
    sq_row = jnp.sum(g * eye, axis=0, keepdims=True)              # (1, N)
    d = jnp.maximum(sq_col + sq_row - 2.0 * g, 0.0)               # (N, N) sq dists

    # Triplet validity masks (AllTripletSelector semantics). Both symmetric.
    same = lcol == lrow                                           # (N, N)
    pos_mask = jnp.where(same & (row_i != col_j), 1.0, 0.0)       # anchor-positive
    neg_mask = jnp.where(same, 0.0, 1.0)                          # anchor-negative

    # len(triplets) = sum_a #pos(a) * #neg(a)
    pos_cnt = jnp.sum(pos_mask, axis=1, keepdims=True)            # (N, 1)
    neg_cnt = jnp.sum(neg_mask, axis=1, keepdims=True)            # (N, 1)
    count = jnp.sum(pos_cnt * neg_cnt, axis=0, keepdims=True)     # (1, 1)

    # Hinge loss summed over all valid (a, p, n). D / masks are symmetric, so
    # d[:, a:a+1] holds D[a, p] over p (sublanes) and d[a:a+1, :] holds
    # D[a, n] over n (lanes). Static unroll over anchors (N is small/static).
    total = jnp.zeros((1, 1), jnp.float32)
    for a in range(n):
        ap = d[:, a:a + 1]                                        # (N, 1): D[a, p]
        an = d[a:a + 1, :]                                        # (1, N): D[a, n]
        hinge = jnp.maximum(ap - an + margin, 0.0)                # (N, N): [p, n]
        valid = pos_mask[:, a:a + 1] * neg_mask[a:a + 1, :]       # (N, N)
        total = total + jnp.sum(jnp.sum(hinge * valid, axis=1, keepdims=True),
                                axis=0, keepdims=True)

    loss_ref[...] = total / count
    count_ref[...] = count


def online_triplet_loss(embeddings, labels, margin):
    """OnlineTripletLoss.forward(embeddings, target) -> (mean_loss, n_triplets)."""
    n = embeddings.shape[0]
    lcol = labels.astype(jnp.int32).reshape(n, 1)
    lrow = labels.astype(jnp.int32).reshape(1, n)
    kernel = functools.partial(_online_triplet_loss_kernel, margin=float(margin))
    loss, count = pl.pallas_call(
        kernel,
        out_shape=(jax.ShapeDtypeStruct((1, 1), jnp.float32),
                   jax.ShapeDtypeStruct((1, 1), jnp.float32)),
        in_specs=[
            pl.BlockSpec(memory_space=pltpu.MemorySpace.VMEM),  # embeddings
            pl.BlockSpec(memory_space=pltpu.MemorySpace.VMEM),  # labels (N,1)
            pl.BlockSpec(memory_space=pltpu.MemorySpace.VMEM),  # labels (1,N)
        ],
        out_specs=(pl.BlockSpec(memory_space=pltpu.MemorySpace.VMEM),
                   pl.BlockSpec(memory_space=pltpu.MemorySpace.VMEM)),
    )(embeddings, lcol, lrow)
    return loss[0, 0], count[0, 0].astype(jnp.int32)


def _reference_loss(embeddings, labels, margin):
    """Pure-JAX batch-all triplet loss, computed per-triplet like the PyTorch code."""
    n = embeddings.shape[0]
    idx = jnp.arange(n)
    a, p, ng = jnp.meshgrid(idx, idx, idx, indexing="ij")
    valid = (labels[a] == labels[p]) & (a != p) & (labels[a] != labels[ng])
    ap_d = jnp.sum((embeddings[a] - embeddings[p]) ** 2, axis=-1)
    an_d = jnp.sum((embeddings[a] - embeddings[ng]) ** 2, axis=-1)
    losses = jnp.maximum(ap_d - an_d + margin, 0.0)
    cnt = jnp.sum(valid)
    return jnp.sum(jnp.where(valid, losses, 0.0)) / cnt, cnt


if __name__ == "__main__":
    batch = 8
    sz_embed = 32
    margin = 1.0

    key = jax.random.PRNGKey(0)
    embeddings = jax.random.normal(key, (batch, sz_embed), dtype=jnp.float32)
    # Deterministic labels with >=2 samples per class so valid triplets exist.
    labels = jnp.array([0, 0, 1, 1, 2, 2, 3, 3], dtype=jnp.int32)

    loss, n_triplets = online_triplet_loss(embeddings, labels, margin)
    loss = jax.block_until_ready(loss)
    n_triplets = jax.block_until_ready(n_triplets)

    ref_loss, ref_cnt = _reference_loss(embeddings, labels, margin)
    assert int(n_triplets) == int(ref_cnt), (n_triplets, ref_cnt)
    # Tolerance covers MXU pass precision for the Gram-matrix distance formula.
    assert jnp.allclose(loss, ref_loss, rtol=1e-2, atol=1e-2), (loss, ref_loss)

    print("KERNEL_OK")
</pallas_src>

<mosaic_0001>
module attributes {stable_mosaic.version = 11 : i64} {
  func.func @_online_triplet_loss_kernel(%arg0: memref<8x32xf32, #tpu.memory_space<vmem>>, %arg1: memref<8x1xi32, #tpu.memory_space<vmem>>, %arg2: memref<1x8xi32, #tpu.memory_space<vmem>>, %arg3: memref<1x1xf32, #tpu.memory_space<vmem>>, %arg4: memref<1x1xf32, #tpu.memory_space<vmem>>) attributes {dimension_semantics = [], scalar_prefetch = 0 : i64, scratch_operands = 0 : i64, tpu.core_type = #tpu.core_type<tc>} {
    %c0 = arith.constant 0 : index
    %c0_0 = arith.constant 0 : index
    %0 = vector.load %arg0[%c0, %c0_0] : memref<8x32xf32, #tpu.memory_space<vmem>>, vector<8x32xf32>
    %c0_1 = arith.constant 0 : index
    %c0_2 = arith.constant 0 : index
    %1 = vector.load %arg1[%c0_1, %c0_2] : memref<8x1xi32, #tpu.memory_space<vmem>>, vector<8x1xi32>
    %c0_3 = arith.constant 0 : index
    %c0_4 = arith.constant 0 : index
    %2 = vector.load %arg2[%c0_3, %c0_4] : memref<1x8xi32, #tpu.memory_space<vmem>>, vector<1x8xi32>
    %cst = arith.constant dense<0.000000e+00> : vector<8x8xf32>
    %3 = tpu.matmul %0, %0, %cst {dimension_numbers = #tpu.dot_dimension_numbers<[1], [1], [0], [0], [0, 0, 1, 0], [], []>, precision = #tpu.contract_precision<fp32>} : vector<8x32xf32>, vector<8x32xf32>, vector<8x8xf32> -> vector<8x8xf32>
    %4 = tpu.iota {dimensions = array<i32: 0>} : vector<8x8xi32>
    %5 = tpu.iota {dimensions = array<i32: 1>} : vector<8x8xi32>
    %6 = arith.cmpi eq, %4, %5 : vector<8x8xi32>
    %7 = arith.extui %6 : vector<8x8xi1> to vector<8x8xi32>
    %8 = arith.sitofp %7 : vector<8x8xi32> to vector<8x8xf32>
    %9 = arith.mulf %3, %8 : vector<8x8xf32>
    %cst_5 = arith.constant dense<0.000000e+00> : vector<8xf32>
    %10 = vector.multi_reduction <add>, %9, %cst_5 [1] : vector<8x8xf32> to vector<8xf32>
    %11 = vector.shape_cast %10 : vector<8xf32> to vector<8x1xf32>
    %12 = arith.mulf %3, %8 : vector<8x8xf32>
    %cst_6 = arith.constant dense<0.000000e+00> : vector<8xf32>
    %13 = vector.multi_reduction <add>, %12, %cst_6 [0] : vector<8x8xf32> to vector<8xf32>
    %14 = vector.shape_cast %13 : vector<8xf32> to vector<1x8xf32>
    %15 = vector.broadcast %11 : vector<8x1xf32> to vector<8x8xf32>
    %16 = vector.broadcast %14 : vector<1x8xf32> to vector<8x8xf32>
    %17 = arith.addf %15, %16 : vector<8x8xf32>
    %cst_7 = arith.constant 2.000000e+00 : f32
    %18 = vector.broadcast %cst_7 : f32 to vector<8x8xf32>
    %19 = arith.mulf %18, %3 : vector<8x8xf32>
    %20 = arith.subf %17, %19 : vector<8x8xf32>
    %cst_8 = arith.constant 0.000000e+00 : f32
    %21 = vector.broadcast %cst_8 : f32 to vector<8x8xf32>
    %22 = arith.maximumf %20, %21 : vector<8x8xf32>
    %23 = vector.broadcast %1 : vector<8x1xi32> to vector<8x8xi32>
    %24 = vector.broadcast %2 : vector<1x8xi32> to vector<8x8xi32>
    %25 = arith.cmpi eq, %23, %24 : vector<8x8xi32>
    %26 = arith.cmpi ne, %4, %5 : vector<8x8xi32>
    %27 = arith.andi %25, %26 : vector<8x8xi1>
    %cst_9 = arith.constant 1.000000e+00 : f32
    %cst_10 = arith.constant 0.000000e+00 : f32
    %28 = vector.broadcast %cst_9 : f32 to vector<8x8xf32>
    %29 = vector.broadcast %cst_10 : f32 to vector<8x8xf32>
    %30 = arith.select %27, %28, %29 : vector<8x8xi1>, vector<8x8xf32>
    %cst_11 = arith.constant 0.000000e+00 : f32
    %cst_12 = arith.constant 1.000000e+00 : f32
    %31 = vector.broadcast %cst_11 : f32 to vector<8x8xf32>
    %32 = vector.broadcast %cst_12 : f32 to vector<8x8xf32>
    %33 = arith.select %25, %31, %32 : vector<8x8xi1>, vector<8x8xf32>
    %cst_13 = arith.constant dense<0.000000e+00> : vector<8xf32>
    %34 = vector.multi_reduction <add>, %30, %cst_13 [1] : vector<8x8xf32> to vector<8xf32>
    %35 = vector.shape_cast %34 : vector<8xf32> to vector<8x1xf32>
    %cst_14 = arith.constant dense<0.000000e+00> : vector<8xf32>
    %36 = vector.multi_reduction <add>, %33, %cst_14 [1] : vector<8x8xf32> to vector<8xf32>
    %37 = vector.shape_cast %36 : vector<8xf32> to vector<8x1xf32>
    %38 = arith.mulf %35, %37 : vector<8x1xf32>
    %cst_15 = arith.constant dense<0.000000e+00> : vector<1xf32>
    %39 = vector.multi_reduction <add>, %38, %cst_15 [0] : vector<8x1xf32> to vector<1xf32>
    %40 = vector.shape_cast %39 : vector<1xf32> to vector<1x1xf32>
    %cst_16 = arith.constant 0.000000e+00 : f32
    %41 = vector.broadcast %cst_16 : f32 to vector<1x1xf32>
    %42 = vector.extract_strided_slice %22 {offsets = [0, 0], sizes = [8, 1], strides = [1, 1]} : vector<8x8xf32> to vector<8x1xf32>
    %43 = vector.extract_strided_slice %22 {offsets = [0, 0], sizes = [1, 8], strides = [1, 1]} : vector<8x8xf32> to vector<1x8xf32>
    %44 = vector.broadcast %42 : vector<8x1xf32> to vector<8x8xf32>
    %45 = vector.broadcast %43 : vector<1x8xf32> to vector<8x8xf32>
    %46 = arith.subf %44, %45 : vector<8x8xf32>
    %cst_17 = arith.constant 1.000000e+00 : f32
    %47 = vector.broadcast %cst_17 : f32 to vector<8x8xf32>
    %48 = arith.addf %46, %47 : vector<8x8xf32>
    %cst_18 = arith.constant 0.000000e+00 : f32
    %49 = vector.broadcast %cst_18 : f32 to vector<8x8xf32>
    %50 = arith.maximumf %48, %49 : vector<8x8xf32>
    %51 = vector.extract_strided_slice %30 {offsets = [0, 0], sizes = [8, 1], strides = [1, 1]} : vector<8x8xf32> to vector<8x1xf32>
    %52 = vector.extract_strided_slice %33 {offsets = [0, 0], sizes = [1, 8], strides = [1, 1]} : vector<8x8xf32> to vector<1x8xf32>
    %53 = vector.broadcast %51 : vector<8x1xf32> to vector<8x8xf32>
    %54 = vector.broadcast %52 : vector<1x8xf32> to vector<8x8xf32>
    %55 = arith.mulf %53, %54 : vector<8x8xf32>
    %56 = arith.mulf %50, %55 : vector<8x8xf32>
    %cst_19 = arith.constant dense<0.000000e+00> : vector<8xf32>
    %57 = vector.multi_reduction <add>, %56, %cst_19 [1] : vector<8x8xf32> to vector<8xf32>
    %58 = vector.shape_cast %57 : vector<8xf32> to vector<8x1xf32>
    %cst_20 = arith.constant dense<0.000000e+00> : vector<1xf32>
    %59 = vector.multi_reduction <add>, %58, %cst_20 [0] : vector<8x1xf32> to vector<1xf32>
    %60 = vector.shape_cast %59 : vector<1xf32> to vector<1x1xf32>
    %61 = arith.addf %41, %60 : vector<1x1xf32>
    %62 = vector.extract_strided_slice %22 {offsets = [0, 1], sizes = [8, 1], strides = [1, 1]} : vector<8x8xf32> to vector<8x1xf32>
    %63 = vector.extract_strided_slice %22 {offsets = [1, 0], sizes = [1, 8], strides = [1, 1]} : vector<8x8xf32> to vector<1x8xf32>
    %64 = vector.broadcast %62 : vector<8x1xf32> to vector<8x8xf32>
    %65 = vector.broadcast %63 : vector<1x8xf32> to vector<8x8xf32>
    %66 = arith.subf %64, %65 : vector<8x8xf32>
    %cst_21 = arith.constant 1.000000e+00 : f32
    %67 = vector.broadcast %cst_21 : f32 to vector<8x8xf32>
    %68 = arith.addf %66, %67 : vector<8x8xf32>
    %cst_22 = arith.constant 0.000000e+00 : f32
    %69 = vector.broadcast %cst_22 : f32 to vector<8x8xf32>
    %70 = arith.maximumf %68, %69 : vector<8x8xf32>
    %71 = vector.extract_strided_slice %30 {offsets = [0, 1], sizes = [8, 1], strides = [1, 1]} : vector<8x8xf32> to vector<8x1xf32>
    %72 = vector.extract_strided_slice %33 {offsets = [1, 0], sizes = [1, 8], strides = [1, 1]} : vector<8x8xf32> to vector<1x8xf32>
    %73 = vector.broadcast %71 : vector<8x1xf32> to vector<8x8xf32>
    %74 = vector.broadcast %72 : vector<1x8xf32> to vector<8x8xf32>
    %75 = arith.mulf %73, %74 : vector<8x8xf32>
    %76 = arith.mulf %70, %75 : vector<8x8xf32>
    %cst_23 = arith.constant dense<0.000000e+00> : vector<8xf32>
    %77 = vector.multi_reduction <add>, %76, %cst_23 [1] : vector<8x8xf32> to vector<8xf32>
    %78 = vector.shape_cast %77 : vector<8xf32> to vector<8x1xf32>
    %cst_24 = arith.constant dense<0.000000e+00> : vector<1xf32>
    %79 = vector.multi_reduction <add>, %78, %cst_24 [0] : vector<8x1xf32> to vector<1xf32>
    %80 = vector.shape_cast %79 : vector<1xf32> to vector<1x1xf32>
    %81 = arith.addf %61, %80 : vector<1x1xf32>
    %82 = vector.extract_strided_slice %22 {offsets = [0, 2], sizes = [8, 1], strides = [1, 1]} : vector<8x8xf32> to vector<8x1xf32>
    %83 = vector.extract_strided_slice %22 {offsets = [2, 0], sizes = [1, 8], strides = [1, 1]} : vector<8x8xf32> to vector<1x8xf32>
    %84 = vector.broadcast %82 : vector<8x1xf32> to vector<8x8xf32>
    %85 = vector.broadcast %83 : vector<1x8xf32> to vector<8x8xf32>
    %86 = arith.subf %84, %85 : vector<8x8xf32>
    %cst_25 = arith.constant 1.000000e+00 : f32
    %87 = vector.broadcast %cst_25 : f32 to vector<8x8xf32>
    %88 = arith.addf %86, %87 : vector<8x8xf32>
    %cst_26 = arith.constant 0.000000e+00 : f32
    %89 = vector.broadcast %cst_26 : f32 to vector<8x8xf32>
    %90 = arith.maximumf %88, %89 : vector<8x8xf32>
    %91 = vector.extract_strided_slice %30 {offsets = [0, 2], sizes = [8, 1], strides = [1, 1]} : vector<8x8xf32> to vector<8x1xf32>
    %92 = vector.extract_strided_slice %33 {offsets = [2, 0], sizes = [1, 8], strides = [1, 1]} : vector<8x8xf32> to vector<1x8xf32>
    %93 = vector.broadcast %91 : vector<8x1xf32> to vector<8x8xf32>
    %94 = vector.broadcast %92 : vector<1x8xf32> to vector<8x8xf32>
    %95 = arith.mulf %93, %94 : vector<8x8xf32>
    %96 = arith.mulf %90, %95 : vector<8x8xf32>
    %cst_27 = arith.constant dense<0.000000e+00> : vector<8xf32>
    %97 = vector.multi_reduction <add>, %96, %cst_27 [1] : vector<8x8xf32> to vector<8xf32>
    %98 = vector.shape_cast %97 : vector<8xf32> to vector<8x1xf32>
    %cst_28 = arith.constant dense<0.000000e+00> : vector<1xf32>
    %99 = vector.multi_reduction <add>, %98, %cst_28 [0] : vector<8x1xf32> to vector<1xf32>
    %100 = vector.shape_cast %99 : vector<1xf32> to vector<1x1xf32>
    %101 = arith.addf %81, %100 : vector<1x1xf32>
    %102 = vector.extract_strided_slice %22 {offsets = [0, 3], sizes = [8, 1], strides = [1, 1]} : vector<8x8xf32> to vector<8x1xf32>
    %103 = vector.extract_strided_slice %22 {offsets = [3, 0], sizes = [1, 8], strides = [1, 1]} : vector<8x8xf32> to vector<1x8xf32>
    %104 = vector.broadcast %102 : vector<8x1xf32> to vector<8x8xf32>
    %105 = vector.broadcast %103 : vector<1x8xf32> to vector<8x8xf32>
    %106 = arith.subf %104, %105 : vector<8x8xf32>
    %cst_29 = arith.constant 1.000000e+00 : f32
    %107 = vector.broadcast %cst_29 : f32 to vector<8x8xf32>
    %108 = arith.addf %106, %107 : vector<8x8xf32>
    %cst_30 = arith.constant 0.000000e+00 : f32
    %109 = vector.broadcast %cst_30 : f32 to vector<8x8xf32>
    %110 = arith.maximumf %108, %109 : vector<8x8xf32>
    %111 = vector.extract_strided_slice %30 {offsets = [0, 3], sizes = [8, 1], strides = [1, 1]} : vector<8x8xf32> to vector<8x1xf32>
    %112 = vector.extract_strided_slice %33 {offsets = [3, 0], sizes = [1, 8], strides = [1, 1]} : vector<8x8xf32> to vector<1x8xf32>
    %113 = vector.broadcast %111 : vector<8x1xf32> to vector<8x8xf32>
    %114 = vector.broadcast %112 : vector<1x8xf32> to vector<8x8xf32>
    %115 = arith.mulf %113, %114 : vector<8x8xf32>
    %116 = arith.mulf %110, %115 : vector<8x8xf32>
    %cst_31 = arith.constant dense<0.000000e+00> : vector<8xf32>
    %117 = vector.multi_reduction <add>, %116, %cst_31 [1] : vector<8x8xf32> to vector<8xf32>
    %118 = vector.shape_cast %117 : vector<8xf32> to vector<8x1xf32>
    %cst_32 = arith.constant dense<0.000000e+00> : vector<1xf32>
    %119 = vector.multi_reduction <add>, %118, %cst_32 [0] : vector<8x1xf32> to vector<1xf32>
    %120 = vector.shape_cast %119 : vector<1xf32> to vector<1x1xf32>
    %121 = arith.addf %101, %120 : vector<1x1xf32>
    %122 = vector.extract_strided_slice %22 {offsets = [0, 4], sizes = [8, 1], strides = [1, 1]} : vector<8x8xf32> to vector<8x1xf32>
    %123 = vector.extract_strided_slice %22 {offsets = [4, 0], sizes = [1, 8], strides = [1, 1]} : vector<8x8xf32> to vector<1x8xf32>
    %124 = vector.broadcast %122 : vector<8x1xf32> to vector<8x8xf32>
    %125 = vector.broadcast %123 : vector<1x8xf32> to vector<8x8xf32>
    %126 = arith.subf %124, %125 : vector<8x8xf32>
    %cst_33 = arith.constant 1.000000e+00 : f32
    %127 = vector.broadcast %cst_33 : f32 to vector<8x8xf32>
    %128 = arith.addf %126, %127 : vector<8x8xf32>
    %cst_34 = arith.constant 0.000000e+00 : f32
    %129 = vector.broadcast %cst_34 : f32 to vector<8x8xf32>
    %130 = arith.maximumf %128, %129 : vector<8x8xf32>
    %131 = vector.extract_strided_slice %30 {offsets = [0, 4], sizes = [8, 1], strides = [1, 1]} : vector<8x8xf32> to vector<8x1xf32>
    %132 = vector.extract_strided_slice %33 {offsets = [4, 0], sizes = [1, 8], strides = [1, 1]} : vector<8x8xf32> to vector<1x8xf32>
    %133 = vector.broadcast %131 : vector<8x1xf32> to vector<8x8xf32>
    %134 = vector.broadcast %132 : vector<1x8xf32> to vector<8x8xf32>
    %135 = arith.mulf %133, %134 : vector<8x8xf32>
    %136 = arith.mulf %130, %135 : vector<8x8xf32>
    %cst_35 = arith.constant dense<0.000000e+00> : vector<8xf32>
    %137 = vector.multi_reduction <add>, %136, %cst_35 [1] : vector<8x8xf32> to vector<8xf32>
    %138 = vector.shape_cast %137 : vector<8xf32> to vector<8x1xf32>
    %cst_36 = arith.constant dense<0.000000e+00> : vector<1xf32>
    %139 = vector.multi_reduction <add>, %138, %cst_36 [0] : vector<8x1xf32> to vector<1xf32>
    %140 = vector.shape_cast %139 : vector<1xf32> to vector<1x1xf32>
    %141 = arith.addf %121, %140 : vector<1x1xf32>
    %142 = vector.extract_strided_slice %22 {offsets = [0, 5], sizes = [8, 1], strides = [1, 1]} : vector<8x8xf32> to vector<8x1xf32>
    %143 = vector.extract_strided_slice %22 {offsets = [5, 0], sizes = [1, 8], strides = [1, 1]} : vector<8x8xf32> to vector<1x8xf32>
    %144 = vector.broadcast %142 : vector<8x1xf32> to vector<8x8xf32>
    %145 = vector.broadcast %143 : vector<1x8xf32> to vector<8x8xf32>
    %146 = arith.subf %144, %145 : vector<8x8xf32>
    %cst_37 = arith.constant 1.000000e+00 : f32
    %147 = vector.broadcast %cst_37 : f32 to vector<8x8xf32>
    %148 = arith.addf %146, %147 : vector<8x8xf32>
    %cst_38 = arith.constant 0.000000e+00 : f32
    %149 = vector.broadcast %cst_38 : f32 to vector<8x8xf32>
    %150 = arith.maximumf %148, %149 : vector<8x8xf32>
    %151 = vector.extract_strided_slice %30 {offsets = [0, 5], sizes = [8, 1], strides = [1, 1]} : vector<8x8xf32> to vector<8x1xf32>
    %152 = vector.extract_strided_slice %33 {offsets = [5, 0], sizes = [1, 8], strides = [1, 1]} : vector<8x8xf32> to vector<1x8xf32>
    %153 = vector.broadcast %151 : vector<8x1xf32> to vector<8x8xf32>
    %154 = vector.broadcast %152 : vector<1x8xf32> to vector<8x8xf32>
    %155 = arith.mulf %153, %154 : vector<8x8xf32>
    %156 = arith.mulf %150, %155 : vector<8x8xf32>
    %cst_39 = arith.constant dense<0.000000e+00> : vector<8xf32>
    %157 = vector.multi_reduction <add>, %156, %cst_39 [1] : vector<8x8xf32> to vector<8xf32>
    %158 = vector.shape_cast %157 : vector<8xf32> to vector<8x1xf32>
    %cst_40 = arith.constant dense<0.000000e+00> : vector<1xf32>
    %159 = vector.multi_reduction <add>, %158, %cst_40 [0] : vector<8x1xf32> to vector<1xf32>
    %160 = vector.shape_cast %159 : vector<1xf32> to vector<1x1xf32>
    %161 = arith.addf %141, %160 : vector<1x1xf32>
    %162 = vector.extract_strided_slice %22 {offsets = [0, 6], sizes = [8, 1], strides = [1, 1]} : vector<8x8xf32> to vector<8x1xf32>
    %163 = vector.extract_strided_slice %22 {offsets = [6, 0], sizes = [1, 8], strides = [1, 1]} : vector<8x8xf32> to vector<1x8xf32>
    %164 = vector.broadcast %162 : vector<8x1xf32> to vector<8x8xf32>
    %165 = vector.broadcast %163 : vector<1x8xf32> to vector<8x8xf32>
    %166 = arith.subf %164, %165 : vector<8x8xf32>
    %cst_41 = arith.constant 1.000000e+00 : f32
    %167 = vector.broadcast %cst_41 : f32 to vector<8x8xf32>
    %168 = arith.addf %166, %167 : vector<8x8xf32>
    %cst_42 = arith.constant 0.000000e+00 : f32
    %169 = vector.broadcast %cst_42 : f32 to vector<8x8xf32>
    %170 = arith.maximumf %168, %169 : vector<8x8xf32>
    %171 = vector.extract_strided_slice %30 {offsets = [0, 6], sizes = [8, 1], strides = [1, 1]} : vector<8x8xf32> to vector<8x1xf32>
    %172 = vector.extract_strided_slice %33 {offsets = [6, 0], sizes = [1, 8], strides = [1, 1]} : vector<8x8xf32> to vector<1x8xf32>
    %173 = vector.broadcast %171 : vector<8x1xf32> to vector<8x8xf32>
    %174 = vector.broadcast %172 : vector<1x8xf32> to vector<8x8xf32>
    %175 = arith.mulf %173, %174 : vector<8x8xf32>
    %176 = arith.mulf %170, %175 : vector<8x8xf32>
    %cst_43 = arith.constant dense<0.000000e+00> : vector<8xf32>
    %177 = vector.multi_reduction <add>, %176, %cst_43 [1] : vector<8x8xf32> to vector<8xf32>
    %178 = vector.shape_cast %177 : vector<8xf32> to vector<8x1xf32>
    %cst_44 = arith.constant dense<0.000000e+00> : vector<1xf32>
    %179 = vector.multi_reduction <add>, %178, %cst_44 [0] : vector<8x1xf32> to vector<1xf32>
    %180 = vector.shape_cast %179 : vector<1xf32> to vector<1x1xf32>
    %181 = arith.addf %161, %180 : vector<1x1xf32>
    %182 = vector.extract_strided_slice %22 {offsets = [0, 7], sizes = [8, 1], strides = [1, 1]} : vector<8x8xf32> to vector<8x1xf32>
    %183 = vector.extract_strided_slice %22 {offsets = [7, 0], sizes = [1, 8], strides = [1, 1]} : vector<8x8xf32> to vector<1x8xf32>
    %184 = vector.broadcast %182 : vector<8x1xf32> to vector<8x8xf32>
    %185 = vector.broadcast %183 : vector<1x8xf32> to vector<8x8xf32>
    %186 = arith.subf %184, %185 : vector<8x8xf32>
    %cst_45 = arith.constant 1.000000e+00 : f32
    %187 = vector.broadcast %cst_45 : f32 to vector<8x8xf32>
    %188 = arith.addf %186, %187 : vector<8x8xf32>
    %cst_46 = arith.constant 0.000000e+00 : f32
    %189 = vector.broadcast %cst_46 : f32 to vector<8x8xf32>
    %190 = arith.maximumf %188, %189 : vector<8x8xf32>
    %191 = vector.extract_strided_slice %30 {offsets = [0, 7], sizes = [8, 1], strides = [1, 1]} : vector<8x8xf32> to vector<8x1xf32>
    %192 = vector.extract_strided_slice %33 {offsets = [7, 0], sizes = [1, 8], strides = [1, 1]} : vector<8x8xf32> to vector<1x8xf32>
    %193 = vector.broadcast %191 : vector<8x1xf32> to vector<8x8xf32>
    %194 = vector.broadcast %192 : vector<1x8xf32> to vector<8x8xf32>
    %195 = arith.mulf %193, %194 : vector<8x8xf32>
    %196 = arith.mulf %190, %195 : vector<8x8xf32>
    %cst_47 = arith.constant dense<0.000000e+00> : vector<8xf32>
    %197 = vector.multi_reduction <add>, %196, %cst_47 [1] : vector<8x8xf32> to vector<8xf32>
    %198 = vector.shape_cast %197 : vector<8xf32> to vector<8x1xf32>
    %cst_48 = arith.constant dense<0.000000e+00> : vector<1xf32>
    %199 = vector.multi_reduction <add>, %198, %cst_48 [0] : vector<8x1xf32> to vector<1xf32>
    %200 = vector.shape_cast %199 : vector<1xf32> to vector<1x1xf32>
    %201 = arith.addf %181, %200 : vector<1x1xf32>
    %202 = arith.divf %201, %40 : vector<1x1xf32>
    %c0_49 = arith.constant 0 : index
    %c0_50 = arith.constant 0 : index
    %203 = vector.load %arg3[%c0_49, %c0_50] : memref<1x1xf32, #tpu.memory_space<vmem>>, vector<1x1xf32>
    tpu.vector_store %arg3[%c0_49, %c0_50], %202 {strides = array<i32>} : memref<1x1xf32, #tpu.memory_space<vmem>>, vector<1x1xf32>,
    %c0_51 = arith.constant 0 : index
    %c0_52 = arith.constant 0 : index
    %204 = vector.load %arg4[%c0_51, %c0_52] : memref<1x1xf32, #tpu.memory_space<vmem>>, vector<1x1xf32>
    tpu.vector_store %arg4[%c0_51, %c0_52], %40 {strides = array<i32>} : memref<1x1xf32, #tpu.memory_space<vmem>>, vector<1x1xf32>,
    return
  }
}

</mosaic_0001>

<llo_original>
// kernel: tpu_custom_call.1
$region0: #{tpu_custom_call.1}
  #allocation0 [shape = 'u32[]', space=smem, size = 0x4, offset = 0x4, fixed_abs, tag = 'smem constant byte address 0x4 - core index']
  #allocation1 [shape = 'u32[144,128]{1,0:T(1,128)}', space=vmem, size = 0x12000, scoped, tag = 'internal scratch']
  %s0 = inlined_call_operand.vmem [shape: f32[8,32], index: 0, kind: input, shape index: {}]
  %s1 = inlined_call_operand.vmem [shape: s32[8,1], index: 1, kind: input, shape index: {}]
  %s2 = inlined_call_operand.vmem [shape: s32[1,8], index: 2, kind: input, shape index: {}]
  %s3 = inlined_call_operand.hbm [shape: f32[1,1], index: 3, kind: output, shape index: {0}]
  %s4 = inlined_call_operand.hbm [shape: f32[1,1], index: 4, kind: output, shape index: {1}]
  %5 = xla_tuple %s3, %s4
  %s6 = sld [smem:[#allocation0]]
  $region30: #{tpu_custom_call.1} parent=0
    _
  %s8 = ssub.s32 1, %s6
  %s9 = scalar_select 0, %s8, %s6
  $region1: #{tpu_custom_call.1} parent=0
    #allocation2 [shape = 'u8[512]{0}', space=vmem, size = 0x400, scoped, tag = 'output window, operand 0, single buffered']
    #allocation3 [shape = 's32[1]{0}', space=sflag, size = 0x4, scoped, tag = 'scoped memory for tpu_custom_call.1']
    #allocation4 [shape = 'u8[512]{0}', space=vmem, size = 0x400, scoped, tag = 'output window, operand 1, single buffered']
    #allocation5 [shape = 's32[1]{0}', space=sflag, size = 0x4, scoped, tag = 'scoped memory for tpu_custom_call.1']
    %10 = vsyncpa [#allocation3], 0
    %11 = vsyncpa [#allocation5], 0
    // Predicated region
    $region2: #{tpu_custom_call.1} parent=1 // pred_check
      _
    $region3: #{tpu_custom_call.1} parent=1 // pred_check_branch
      %13 = sbr.rel (0) target = $region5
    $region4: #{tpu_custom_call.1} parent=1 // pred_region
      _
    $region5: #{tpu_custom_call.1} parent=1 // pred_fallthru
      _
    // Predicated region
    $region6: #{tpu_custom_call.1} parent=1 // pred_check
      _
    $region7: #{tpu_custom_call.1} parent=1 // pred_check_branch
      %15 = sbr.rel (0) target = $region9
    $region8: #{tpu_custom_call.1} parent=1 // pred_region
      _
    $region9: #{tpu_custom_call.1} parent=1 // pred_fallthru
      _
    // Predicated region
    $region10: #{tpu_custom_call.1} parent=1 // pred_check
      _
    $region11: #{tpu_custom_call.1} parent=1 // pred_check_branch
      %17 = sbr.rel (0) target = $region13
    $region12: #{tpu_custom_call.1} parent=1 // pred_region
      _
    $region13: #{tpu_custom_call.1} parent=1 // pred_fallthru
      _
    %v18 = vld [vmem:[%s0] sm:$0xff]
    %v19 = vld [vmem:[%s1] sm:$0xff]
    %v20 = vld [vmem:[%s2] sm:$0x1]
    %vm21 = vcmask 261120
    %v23 = vsel %vm21, %v18, 0
    %25 = vmatprep.subr.mxu0 0.0
    %v26 = vand.u32 %v23, 4294901760
    %27 = vmatpush1.xpose.msra.mxu0 %v26
    %28 = vmatprep.subr.mxu0 0.0
    %29 = vmatpush1.xpose.msra.mxu0 0.0
    %30 = vmatprep.subr.mxu0 0.0
    %31 = vmatpush1.xpose.msra.mxu0 0.0
    %32 = vmatprep.subr.mxu0 0.0
    %33 = vmatpush1.xpose.msra.mxu0 0.0
    %34 = vmatprep.subr.mxu0 0.0
    %35 = vmatpush1.xpose.msra.mxu0 0.0
    %36 = vmatprep.subr.mxu0 0.0
    %37 = vmatpush1.xpose.msra.mxu0 0.0
    %38 = vmatprep.subr.mxu0 0.0
    %39 = vmatpush1.xpose.msra.mxu0 0.0
    %40 = vmatprep.subr.mxu0 0.0
    %41 = vmatpush1.xpose.msra.mxu0 0.0
    %42 = vmatprep.subr.mxu0 0.0
    %43 = vmatpush1.xpose.msra.mxu0 0.0
    %44 = vmatprep.subr.mxu0 0.0
    %45 = vmatpush1.xpose.msra.mxu0 0.0
    %46 = vmatprep.subr.mxu0 0.0
    %47 = vmatpush1.xpose.msra.mxu0 0.0
    %48 = vmatprep.subr.mxu0 0.0
    %49 = vmatpush1.xpose.msra.mxu0 0.0
    %50 = vmatprep.subr.mxu0 0.0
    %51 = vmatpush1.xpose.msra.mxu0 0.0
    %52 = vmatprep.subr.mxu0 0.0
    %53 = vmatpush1.xpose.msra.mxu0 0.0
    %54 = vmatprep.subr.mxu0 0.0
    %55 = vmatpush1.xpose.msra.mxu0 0.0
    %56 = vmatprep.subr.mxu0 0.0
    %57 = vmatpush1.xpose.msra.mxu0 0.0
    %58 = vmatprep.subr.mxu0 0.0
    %59 = vmatpush1.xpose.msra.mxu0 0.0
    %60 = vmatprep.subr.mxu0 0.0
    %61 = vmatpush1.xpose.msra.mxu0 0.0
    %62 = vmatprep.subr.mxu0 0.0
    %63 = vmatpush1.xpose.msra.mxu0 0.0
    %64 = vmatprep.subr.mxu0 0.0
    %65 = vmatpush1.xpose.msra.mxu0 0.0
    %66 = vmatprep.subr.mxu0 0.0
    %67 = vmatpush1.xpose.msra.mxu0 0.0
    %68 = vmatprep.subr.mxu0 0.0
    %69 = vmatpush1.xpose.msra.mxu0 0.0
    %70 = vmatprep.subr.mxu0 0.0
    %71 = vmatpush1.xpose.msra.mxu0 0.0
    %72 = vmatprep.subr.mxu0 0.0
    %73 = vmatpush1.xpose.msra.mxu0 0.0
    %74 = vmatprep.subr.mxu0 0.0
    %75 = vmatpush1.xpose.msra.mxu0 0.0
    %76 = vmatprep.subr.mxu0 0.0
    %77 = vmatpush1.xpose.msra.mxu0 0.0
    %78 = vmatprep.subr.mxu0 0.0
    %79 = vmatpush1.xpose.msra.mxu0 0.0
    %80 = vmatprep.subr.mxu0 0.0
    %81 = vmatpush1.xpose.msra.mxu0 0.0
    %82 = vmatprep.subr.mxu0 0.0
    %83 = vmatpush1.xpose.msra.mxu0 0.0
    %84 = vmatprep.subr.mxu0 0.0
    %85 = vmatpush1.xpose.msra.mxu0 0.0
    %86 = vmatprep.subr.mxu0 0.0
    %87 = vmatpush1.xpose.msra.mxu0 0.0
    %88 = vmatprep.subr.mxu0 0.0
    %89 = vmatpush1.xpose.msra.mxu0 0.0
    %90 = vmatprep.mubr.f32.mxu0 0.0
    %v91 = vand.u32 %v23, 4294901760
    %v92 = vsub.f32 %v23, %v91
    %v93 = vand.u32 %v92, 4294901760
    %v94 = vsub.f32 %v92, %v93
    %v95 = vand.u32 %v94, 4294901760
    %96 = vmatmul.mubr.f32.gmra.mrb[0].mxu0 %v95
    %v97 = vpop.f32.mrb[0].mxu0
    %v98 = vadd.f32 0.0, %v97
    %v99 = vpop.f32.mrb[0].mxu0
    %100 = vdwg.mxu0
    %101 = vmatprep.subr.mxu0 0.0
    %v102 = vand.u32 %v23, 4294901760
    %v103 = vsub.f32 %v23, %v102
    %v104 = vand.u32 %v103, 4294901760
    %v105 = vsub.f32 %v103, %v104
    %v106 = vand.u32 %v105, 4294901760
    %107 = vmatpush1.xpose.msra.mxu0 %v106
    %108 = vmatprep.subr.mxu0 0.0
    %109 = vmatpush1.xpose.msra.mxu0 0.0
    %110 = vmatprep.subr.mxu0 0.0
    %111 = vmatpush1.xpose.msra.mxu0 0.0
    %112 = vmatprep.subr.mxu0 0.0
    %113 = vmatpush1.xpose.msra.mxu0 0.0
    %114 = vmatprep.subr.mxu0 0.0
    %115 = vmatpush1.xpose.msra.mxu0 0.0
    %116 = vmatprep.subr.mxu0 0.0
    %117 = vmatpush1.xpose.msra.mxu0 0.0
    %118 = vmatprep.subr.mxu0 0.0
    %119 = vmatpush1.xpose.msra.mxu0 0.0
    %120 = vmatprep.subr.mxu0 0.0
    %121 = vmatpush1.xpose.msra.mxu0 0.0
    %122 = vmatprep.subr.mxu0 0.0
    %123 = vmatpush1.xpose.msra.mxu0 0.0
    %124 = vmatprep.subr.mxu0 0.0
    %125 = vmatpush1.xpose.msra.mxu0 0.0
    %126 = vmatprep.subr.mxu0 0.0
    %127 = vmatpush1.xpose.msra.mxu0 0.0
    %128 = vmatprep.subr.mxu0 0.0
    %129 = vmatpush1.xpose.msra.mxu0 0.0
    %130 = vmatprep.subr.mxu0 0.0
    %131 = vmatpush1.xpose.msra.mxu0 0.0
    %132 = vmatprep.subr.mxu0 0.0
    %133 = vmatpush1.xpose.msra.mxu0 0.0
    %134 = vmatprep.subr.mxu0 0.0
    %135 = vmatpush1.xpose.msra.mxu0 0.0
    %136 = vmatprep.subr.mxu0 0.0
    %137 = vmatpush1.xpose.msra.mxu0 0.0
    %138 = vmatprep.subr.mxu0 0.0
    %139 = vmatpush1.xpose.msra.mxu0 0.0
    %140 = vmatprep.subr.mxu0 0.0
    %141 = vmatpush1.xpose.msra.mxu0 0.0
    %142 = vmatprep.subr.mxu0 0.0
    %143 = vmatpush1.xpose.msra.mxu0 0.0
    %144 = vmatprep.subr.mxu0 0.0
    %145 = vmatpush1.xpose.msra.mxu0 0.0
    %146 = vmatprep.subr.mxu0 0.0
    %147 = vmatpush1.xpose.msra.mxu0 0.0
    %148 = vmatprep.subr.mxu0 0.0
    %149 = vmatpush1.xpose.msra.mxu0 0.0
    %150 = vmatprep.subr.mxu0 0.0
    %151 = vmatpush1.xpose.msra.mxu0 0.0
    %152 = vmatprep.subr.mxu0 0.0
    %153 = vmatpush1.xpose.msra.mxu0 0.0
    %154 = vmatprep.subr.mxu0 0.0
    %155 = vmatpush1.xpose.msra.mxu0 0.0
    %156 = vmatprep.subr.mxu0 0.0
    %157 = vmatpush1.xpose.msra.mxu0 0.0
    %158 = vmatprep.subr.mxu0 0.0
    %159 = vmatpush1.xpose.msra.mxu0 0.0
    %160 = vmatprep.subr.mxu0 0.0
    %161 = vmatpush1.xpose.msra.mxu0 0.0
    %162 = vmatprep.subr.mxu0 0.0
    %163 = vmatpush1.xpose.msra.mxu0 0.0
    %164 = vmatprep.subr.mxu0 0.0
    %165 = vmatpush1.xpose.msra.mxu0 0.0
    %166 = vmatprep.subr.mxu0 0.0
    %167 = vmatpush1.xpose.msra.mxu0 0.0
    %168 = vmatprep.subr.mxu0 0.0
    %169 = vmatpush1.xpose.msra.mxu0 0.0
    %170 = vmatprep.mubr.f32.mxu0 0.0
    %v171 = vand.u32 %v23, 4294901760
    %172 = vmatmul.mubr.f32.gmra.mrb[0].mxu0 %v171
    %v173 = vpop.f32.mrb[0].mxu0
    %v174 = vadd.f32 %v98, %v173
    %v175 = vpop.f32.mrb[0].mxu0
    %176 = vdwg.mxu0
    %177 = vmatprep.subr.mxu0 0.0
    %v178 = vand.u32 %v23, 4294901760
    %v179 = vsub.f32 %v23, %v178
    %180 = vmatpush1.xpose.msra.mxu0 %v179
    %181 = vmatprep.subr.mxu0 0.0
    %182 = vmatpush1.xpose.msra.mxu0 0.0
    %183 = vmatprep.subr.mxu0 0.0
    %184 = vmatpush1.xpose.msra.mxu0 0.0
    %185 = vmatprep.subr.mxu0 0.0
    %186 = vmatpush1.xpose.msra.mxu0 0.0
    %187 = vmatprep.subr.mxu0 0.0
    %188 = vmatpush1.xpose.msra.mxu0 0.0
    %189 = vmatprep.subr.mxu0 0.0
    %190 = vmatpush1.xpose.msra.mxu0 0.0
    %191 = vmatprep.subr.mxu0 0.0
    %192 = vmatpush1.xpose.msra.mxu0 0.0
    %193 = vmatprep.subr.mxu0 0.0
    %194 = vmatpush1.xpose.msra.mxu0 0.0
    %195 = vmatprep.subr.mxu0 0.0
    %196 = vmatpush1.xpose.msra.mxu0 0.0
    %197 = vmatprep.subr.mxu0 0.0
    %198 = vmatpush1.xpose.msra.mxu0 0.0
    %199 = vmatprep.subr.mxu0 0.0
    %200 = vmatpush1.xpose.msra.mxu0 0.0
    %201 = vmatprep.subr.mxu0 0.0
    %202 = vmatpush1.xpose.msra.mxu0 0.0
    %203 = vmatprep.subr.mxu0 0.0
    %204 = vmatpush1.xpose.msra.mxu0 0.0
    %205 = vmatprep.subr.mxu0 0.0
    %206 = vmatpush1.xpose.msra.mxu0 0.0
    %207 = vmatprep.subr.mxu0 0.0
    %208 = vmatpush1.xpose.msra.mxu0 0.0
    %209 = vmatprep.subr.mxu0 0.0
    %210 = vmatpush1.xpose.msra.mxu0 0.0
    %211 = vmatprep.subr.mxu0 0.0
    %212 = vmatpush1.xpose.msra.mxu0 0.0
    %213 = vmatprep.subr.mxu0 0.0
    %214 = vmatpush1.xpose.msra.mxu0 0.0
    %215 = vmatprep.subr.mxu0 0.0
    %216 = vmatpush1.xpose.msra.mxu0 0.0
    %217 = vmatprep.subr.mxu0 0.0
    %218 = vmatpush1.xpose.msra.mxu0 0.0
    %219 = vmatprep.subr.mxu0 0.0
    %220 = vmatpush1.xpose.msra.mxu0 0.0
    %221 = vmatprep.subr.mxu0 0.0
    %222 = vmatpush1.xpose.msra.mxu0 0.0
    %223 = vmatprep.subr.mxu0 0.0
    %224 = vmatpush1.xpose.msra.mxu0 0.0
    %225 = vmatprep.subr.mxu0 0.0
    %226 = vmatpush1.xpose.msra.mxu0 0.0
    %227 = vmatprep.subr.mxu0 0.0
    %228 = vmatpush1.xpose.msra.mxu0 0.0
    %229 = vmatprep.subr.mxu0 0.0
    %230 = vmatpush1.xpose.msra.mxu0 0.0
    %231 = vmatprep.subr.mxu0 0.0
    %232 = vmatpush1.xpose.msra.mxu0 0.0
    %233 = vmatprep.subr.mxu0 0.0
    %234 = vmatpush1.xpose.msra.mxu0 0.0
    %235 = vmatprep.subr.mxu0 0.0
    %236 = vmatpush1.xpose.msra.mxu0 0.0
    %237 = vmatprep.subr.mxu0 0.0
    %238 = vmatpush1.xpose.msra.mxu0 0.0
    %239 = vmatprep.subr.mxu0 0.0
    %240 = vmatpush1.xpose.msra.mxu0 0.0
    %241 = vmatprep.subr.mxu0 0.0
    %242 = vmatpush1.xpose.msra.mxu0 0.0
    %243 = vmatprep.mubr.f32.mxu0 0.0
    %v244 = vand.u32 %v23, 4294901760
    %v245 = vsub.f32 %v23, %v244
    %246 = vmatmul.mubr.f32.gmra.mrb[0].mxu0 %v245
    %v247 = vpop.f32.mrb[0].mxu0
    %v248 = vadd.f32 %v174, %v247
    %v249 = vpop.f32.mrb[0].mxu0
    %250 = vdwg.mxu0
    %251 = vmatprep.subr.mxu0 0.0
    %v252 = vand.u32 %v23, 4294901760
    %253 = vmatpush1.xpose.msra.mxu0 %v252
    %254 = vmatprep.subr.mxu0 0.0
    %255 = vmatpush1.xpose.msra.mxu0 0.0
    %256 = vmatprep.subr.mxu0 0.0
    %257 = vmatpush1.xpose.msra.mxu0 0.0
    %258 = vmatprep.subr.mxu0 0.0
    %259 = vmatpush1.xpose.msra.mxu0 0.0
    %260 = vmatprep.subr.mxu0 0.0
    %261 = vmatpush1.xpose.msra.mxu0 0.0
    %262 = vmatprep.subr.mxu0 0.0
    %263 = vmatpush1.xpose.msra.mxu0 0.0
    %264 = vmatprep.subr.mxu0 0.0
    %265 = vmatpush1.xpose.msra.mxu0 0.0
    %266 = vmatprep.subr.mxu0 0.0
    %267 = vmatpush1.xpose.msra.mxu0 0.0
    %268 = vmatprep.subr.mxu0 0.0
    %269 = vmatpush1.xpose.msra.mxu0 0.0
    %270 = vmatprep.subr.mxu0 0.0
    %271 = vmatpush1.xpose.msra.mxu0 0.0
    %272 = vmatprep.subr.mxu0 0.0
    %273 = vmatpush1.xpose.msra.mxu0 0.0
    %274 = vmatprep.subr.mxu0 0.0
    %275 = vmatpush1.xpose.msra.mxu0 0.0
    %276 = vmatprep.subr.mxu0 0.0
    %277 = vmatpush1.xpose.msra.mxu0 0.0
    %278 = vmatprep.subr.mxu0 0.0
    %279 = vmatpush1.xpose.msra.mxu0 0.0
    %280 = vmatprep.subr.mxu0 0.0
    %281 = vmatpush1.xpose.msra.mxu0 0.0
    %282 = vmatprep.subr.mxu0 0.0
    %283 = vmatpush1.xpose.msra.mxu0 0.0
    %284 = vmatprep.subr.mxu0 0.0
    %285 = vmatpush1.xpose.msra.mxu0 0.0
    %286 = vmatprep.subr.mxu0 0.0
    %287 = vmatpush1.xpose.msra.mxu0 0.0
    %288 = vmatprep.subr.mxu0 0.0
    %289 = vmatpush1.xpose.msra.mxu0 0.0
    %290 = vmatprep.subr.mxu0 0.0
    %291 = vmatpush1.xpose.msra.mxu0 0.0
    %292 = vmatprep.subr.mxu0 0.0
    %293 = vmatpush1.xpose.msra.mxu0 0.0
    %294 = vmatprep.subr.mxu0 0.0
    %295 = vmatpush1.xpose.msra.mxu0 0.0
    %296 = vmatprep.subr.mxu0 0.0
    %297 = vmatpush1.xpose.msra.mxu0 0.0
    %298 = vmatprep.subr.mxu0 0.0
    %299 = vmatpush1.xpose.msra.mxu0 0.0
    %300 = vmatprep.subr.mxu0 0.0
    %301 = vmatpush1.xpose.msra.mxu0 0.0
    %302 = vmatprep.subr.mxu0 0.0
    %303 = vmatpush1.xpose.msra.mxu0 0.0
    %304 = vmatprep.subr.mxu0 0.0
    %305 = vmatpush1.xpose.msra.mxu0 0.0
    %306 = vmatprep.subr.mxu0 0.0
    %307 = vmatpush1.xpose.msra.mxu0 0.0
    %308 = vmatprep.subr.mxu0 0.0
    %309 = vmatpush1.xpose.msra.mxu0 0.0
    %310 = vmatprep.subr.mxu0 0.0
    %311 = vmatpush1.xpose.msra.mxu0 0.0
    %312 = vmatprep.subr.mxu0 0.0
    %313 = vmatpush1.xpose.msra.mxu0 0.0
    %314 = vmatprep.subr.mxu0 0.0
    %315 = vmatpush1.xpose.msra.mxu0 0.0
    %316 = vmatprep.mubr.f32.mxu0 0.0
    %v317 = vand.u32 %v23, 4294901760
    %v318 = vsub.f32 %v23, %v317
    %v319 = vand.u32 %v318, 4294901760
    %320 = vmatmul.mubr.f32.gmra.mrb[0].mxu0 %v319
    %v321 = vpop.f32.mrb[0].mxu0
    %v322 = vadd.f32 %v248, %v321
    %v323 = vpop.f32.mrb[0].mxu0
    %324 = vdwg.mxu0
    %325 = vmatprep.subr.mxu0 0.0
    %v326 = vand.u32 %v23, 4294901760
    %v327 = vsub.f32 %v23, %v326
    %v328 = vand.u32 %v327, 4294901760
    %329 = vmatpush1.xpose.msra.mxu0 %v328
    %330 = vmatprep.subr.mxu0 0.0
    %331 = vmatpush1.xpose.msra.mxu0 0.0
    %332 = vmatprep.subr.mxu0 0.0
    %333 = vmatpush1.xpose.msra.mxu0 0.0
    %334 = vmatprep.subr.mxu0 0.0
    %335 = vmatpush1.xpose.msra.mxu0 0.0
    %336 = vmatprep.subr.mxu0 0.0
    %337 = vmatpush1.xpose.msra.mxu0 0.0
    %338 = vmatprep.subr.mxu0 0.0
    %339 = vmatpush1.xpose.msra.mxu0 0.0
    %340 = vmatprep.subr.mxu0 0.0
    %341 = vmatpush1.xpose.msra.mxu0 0.0
    %342 = vmatprep.subr.mxu0 0.0
    %343 = vmatpush1.xpose.msra.mxu0 0.0
    %344 = vmatprep.subr.mxu0 0.0
    %345 = vmatpush1.xpose.msra.mxu0 0.0
    %346 = vmatprep.subr.mxu0 0.0
    %347 = vmatpush1.xpose.msra.mxu0 0.0
    %348 = vmatprep.subr.mxu0 0.0
    %349 = vmatpush1.xpose.msra.mxu0 0.0
    %350 = vmatprep.subr.mxu0 0.0
    %351 = vmatpush1.xpose.msra.mxu0 0.0
    %352 = vmatprep.subr.mxu0 0.0
    %353 = vmatpush1.xpose.msra.mxu0 0.0
    %354 = vmatprep.subr.mxu0 0.0
    %355 = vmatpush1.xpose.msra.mxu0 0.0
    %356 = vmatprep.subr.mxu0 0.0
    %357 = vmatpush1.xpose.msra.mxu0 0.0
    %358 = vmatprep.subr.mxu0 0.0
    %359 = vmatpush1.xpose.msra.mxu0 0.0
    %360 = vmatprep.subr.mxu0 0.0
    %361 = vmatpush1.xpose.msra.mxu0 0.0
    %362 = vmatprep.subr.mxu0 0.0
    %363 = vmatpush1.xpose.msra.mxu0 0.0
    %364 = vmatprep.subr.mxu0 0.0
    %365 = vmatpush1.xpose.msra.mxu0 0.0
    %366 = vmatprep.subr.mxu0 0.0
    %367 = vmatpush1.xpose.msra.mxu0 0.0
    %368 = vmatprep.subr.mxu0 0.0
    %369 = vmatpush1.xpose.msra.mxu0 0.0
    %370 = vmatprep.subr.mxu0 0.0
    %371 = vmatpush1.xpose.msra.mxu0 0.0
    %372 = vmatprep.subr.mxu0 0.0
    %373 = vmatpush1.xpose.msra.mxu0 0.0
    %374 = vmatprep.subr.mxu0 0.0
    %375 = vmatpush1.xpose.msra.mxu0 0.0
    %376 = vmatprep.subr.mxu0 0.0
    %377 = vmatpush1.xpose.msra.mxu0 0.0
    %378 = vmatprep.subr.mxu0 0.0
    %379 = vmatpush1.xpose.msra.mxu0 0.0
    %380 = vmatprep.subr.mxu0 0.0
    %381 = vmatpush1.xpose.msra.mxu0 0.0
    %382 = vmatprep.subr.mxu0 0.0
    %383 = vmatpush1.xpose.msra.mxu0 0.0
    %384 = vmatprep.subr.mxu0 0.0
    %385 = vmatpush1.xpose.msra.mxu0 0.0
    %386 = vmatprep.subr.mxu0 0.0
    %387 = vmatpush1.xpose.msra.mxu0 0.0
    %388 = vmatprep.subr.mxu0 0.0
    %389 = vmatpush1.xpose.msra.mxu0 0.0
    %390 = vmatprep.subr.mxu0 0.0
    %391 = vmatpush1.xpose.msra.mxu0 0.0
    %392 = vmatprep.mubr.f32.mxu0 0.0
    %v393 = vand.u32 %v23, 4294901760
    %394 = vmatmul.mubr.f32.gmra.mrb[0].mxu0 %v393
    %v395 = vpop.f32.mrb[0].mxu0
    %v396 = vadd.f32 %v322, %v395
    %v397 = vpop.f32.mrb[0].mxu0
    %398 = vdwg.mxu0
    %399 = vmatprep.subr.mxu0 0.0
    %v400 = vand.u32 %v23, 4294901760
    %401 = vmatpush1.xpose.msra.mxu0 %v400
    %402 = vmatprep.subr.mxu0 0.0
    %403 = vmatpush1.xpose.msra.mxu0 0.0
    %404 = vmatprep.subr.mxu0 0.0
    %405 = vmatpush1.xpose.msra.mxu0 0.0
    %406 = vmatprep.subr.mxu0 0.0
    %407 = vmatpush1.xpose.msra.mxu0 0.0
    %408 = vmatprep.subr.mxu0 0.0
    %409 = vmatpush1.xpose.msra.mxu0 0.0
    %410 = vmatprep.subr.mxu0 0.0
    %411 = vmatpush1.xpose.msra.mxu0 0.0
    %412 = vmatprep.subr.mxu0 0.0
    %413 = vmatpush1.xpose.msra.mxu0 0.0
    %414 = vmatprep.subr.mxu0 0.0
    %415 = vmatpush1.xpose.msra.mxu0 0.0
    %416 = vmatprep.subr.mxu0 0.0
    %417 = vmatpush1.xpose.msra.mxu0 0.0
    %418 = vmatprep.subr.mxu0 0.0
    %419 = vmatpush1.xpose.msra.mxu0 0.0
    %420 = vmatprep.subr.mxu0 0.0
    %421 = vmatpush1.xpose.msra.mxu0 0.0
    %422 = vmatprep.subr.mxu0 0.0
    %423 = vmatpush1.xpose.msra.mxu0 0.0
    %424 = vmatprep.subr.mxu0 0.0
    %425 = vmatpush1.xpose.msra.mxu0 0.0
    %426 = vmatprep.subr.mxu0 0.0
    %427 = vmatpush1.xpose.msra.mxu0 0.0
    %428 = vmatprep.subr.mxu0 0.0
    %429 = vmatpush1.xpose.msra.mxu0 0.0
    %430 = vmatprep.subr.mxu0 0.0
    %431 = vmatpush1.xpose.msra.mxu0 0.0
    %432 = vmatprep.subr.mxu0 0.0
    %433 = vmatpush1.xpose.msra.mxu0 0.0
    %434 = vmatprep.subr.mxu0 0.0
    %435 = vmatpush1.xpose.msra.mxu0 0.0
    %436 = vmatprep.subr.mxu0 0.0
    %437 = vmatpush1.xpose.msra.mxu0 0.0
    %438 = vmatprep.subr.mxu0 0.0
    %439 = vmatpush1.xpose.msra.mxu0 0.0
    %440 = vmatprep.subr.mxu0 0.0
    %441 = vmatpush1.xpose.msra.mxu0 0.0
    %442 = vmatprep.subr.mxu0 0.0
    %443 = vmatpush1.xpose.msra.mxu0 0.0
    %444 = vmatprep.subr.mxu0 0.0
    %445 = vmatpush1.xpose.msra.mxu0 0.0
    %446 = vmatprep.subr.mxu0 0.0
    %447 = vmatpush1.xpose.msra.mxu0 0.0
    %448 = vmatprep.subr.mxu0 0.0
    %449 = vmatpush1.xpose.msra.mxu0 0.0
    %450 = vmatprep.subr.mxu0 0.0
    %451 = vmatpush1.xpose.msra.mxu0 0.0
    %452 = vmatprep.subr.mxu0 0.0
    %453 = vmatpush1.xpose.msra.mxu0 0.0
    %454 = vmatprep.subr.mxu0 0.0
    %455 = vmatpush1.xpose.msra.mxu0 0.0
    %456 = vmatprep.subr.mxu0 0.0
    %457 = vmatpush1.xpose.msra.mxu0 0.0
    %458 = vmatprep.subr.mxu0 0.0
    %459 = vmatpush1.xpose.msra.mxu0 0.0
    %460 = vmatprep.subr.mxu0 0.0
    %461 = vmatpush1.xpose.msra.mxu0 0.0
    %462 = vmatprep.subr.mxu0 0.0
    %463 = vmatpush1.xpose.msra.mxu0 0.0
    %464 = vmatprep.mubr.f32.mxu0 0.0
    %v465 = vand.u32 %v23, 4294901760
    %466 = vmatmul.mubr.f32.gmra.mrb[0].mxu0 %v465
    %v467 = vpop.f32.mrb[0].mxu0
    %v468 = vadd.f32 %v396, %v467
    %v469 = vpop.f32.mrb[0].mxu0
    %470 = vdwg.mxu0
    %v471 = vlaneseq
    %v472 = vshrl.u32 %v471, 7
    %v473 = vlaneseq
    %v474 = vand.u32 %v473, 127
    %vm475 = vcmp.eq.s32.totalorder %v472, %v474
    %v476 = vsel %vm475, 1, 0
    %v477 = vcvt.s32.f32 %v476
    %v478 = vmul.f32 %v468, %v477
    %vm479 = vcmask 64512
    %v480 = vsel %vm479, %v478, 0.0
    %481 = vadd.xlane.f32.xlu0 %v480
    %v482 = vpop.xlane.xlu0 %481
    %v483 = vrot.slane %v480, 4
    %v484 = vadd.f32 %v480, %v483
    %v485 = vrot.slane %v484, 2
    %v486 = vadd.f32 %v484, %v485
    %v487 = vrot.slane %v486, 1
    %v488 = vadd.f32 %v486, %v487
    %v489 = vadd.f32 %v482, %v488
    %v490 = vmul.f32 %v468, 2.0
    %v491 = vsub.f32 %v489, %v490
    %v492 = vmax.f32 %v491, 0.0
    %493 = vset.pattern.permute.xlu0 0
    %494 = vperm.xlu0 %493, %v19
    %v495 = vpop.permute.xlu0 %494
    %v496 = vlaneseq
    %v497 = vshrl.u32 %v496, 7
    %v498 = vsub.s32 0, %v497
    %v499 = vrot.slane %v20, %v498
    %vm500 = vcmp.eq.s32.totalorder %v495, %v499
    %vm501 = vcmp.ne.s32.totalorder %v472, %v474
    %vm502 = vmand %vm500, %vm501
    %v503 = vsel %vm502, 1.0, 0.0
    %v504 = vsel %vm500, 0.0, 1.0
    %v505 = vsel %vm479, %v503, 0.0
    %506 = vadd.xlane.f32.xlu0 %v505
    %v507 = vpop.xlane.xlu0 %506
    %v508 = vsel %vm479, %v504, 0.0
    %509 = vadd.xlane.f32.xlu0 %v508
    %v510 = vpop.xlane.xlu0 %509
    %v511 = vmul.f32 %v507, %v510
    %v512 = vrot.slane %v511, 4
    %v513 = vadd.f32 %v511, %v512
    %v514 = vrot.slane %v513, 2
    %v515 = vadd.f32 %v513, %v514
    %v516 = vrot.slane %v515, 1
    %v517 = vadd.f32 %v515, %v516
    %519 = vset.pattern.permute.xlu0 0
    %520 = vperm.xlu0 %519, %v492
    %v521 = vpop.permute.xlu0 %520
    %v523 = vlaneseq
    %v524 = vshrl.u32 %v523, 7
    %v525 = vsub.s32 0, %v524
    %v526 = vrot.slane %v492, %v525
    %v527 = vsub.f32 %v521, %v526
    %v528 = vadd.f32 %v527, 1.0
    %v529 = vmax.f32 %v528, 0.0
    %531 = vset.pattern.permute.xlu0 0
    %532 = vperm.xlu0 %531, %v503
    %v533 = vpop.permute.xlu0 %532
    %v535 = vlaneseq
    %v536 = vshrl.u32 %v535, 7
    %v537 = vsub.s32 0, %v536
    %v538 = vrot.slane %v504, %v537
    %v539 = vmul.f32 %v533, %v538
    %v540 = vmul.f32 %v529, %v539
    %v541 = vsel %vm479, %v540, 0.0
    %542 = vadd.xlane.f32.xlu0 %v541
    %v543 = vpop.xlane.xlu0 %542
    %v544 = vrot.slane %v543, 4
    %v545 = vadd.f32 %v543, %v544
    %v546 = vrot.slane %v545, 2
    %v547 = vadd.f32 %v545, %v546
    %v548 = vrot.slane %v547, 1
    %v549 = vadd.f32 %v547, %v548
    %v550 = vadd.f32 %v549, 0.0
    %551 = vset.pattern.permute.xlu0 1
    %552 = vperm.xlu0 %551, %v492
    %v553 = vpop.permute.xlu0 %552
    %v555 = vlaneseq
    %v556 = vshrl.u32 %v555, 7
    %v557 = vsub.s32 1, %v556
    %v558 = vrot.slane %v492, %v557
    %v559 = vsub.f32 %v553, %v558
    %v560 = vadd.f32 %v559, 1.0
    %v561 = vmax.f32 %v560, 0.0
    %562 = vset.pattern.permute.xlu0 1
    %563 = vperm.xlu0 %562, %v503
    %v564 = vpop.permute.xlu0 %563
    %v566 = vlaneseq
    %v567 = vshrl.u32 %v566, 7
    %v568 = vsub.s32 1, %v567
    %v569 = vrot.slane %v504, %v568
    %v570 = vmul.f32 %v564, %v569
    %v571 = vmul.f32 %v561, %v570
    %v572 = vsel %vm479, %v571, 0.0
    %573 = vadd.xlane.f32.xlu0 %v572
    %v574 = vpop.xlane.xlu0 %573
    %v575 = vrot.slane %v574, 4
    %v576 = vadd.f32 %v574, %v575
    %v577 = vrot.slane %v576, 2
    %v578 = vadd.f32 %v576, %v577
    %v579 = vrot.slane %v578, 1
    %v580 = vadd.f32 %v578, %v579
    %v581 = vadd.f32 %v550, %v580
    %582 = vset.pattern.permute.xlu0 2
    %583 = vperm.xlu0 %582, %v492
    %v584 = vpop.permute.xlu0 %583
    %v586 = vlaneseq
    %v587 = vshrl.u32 %v586, 7
    %v588 = vsub.s32 2, %v587
    %v589 = vrot.slane %v492, %v588
    %v590 = vsub.f32 %v584, %v589
    %v591 = vadd.f32 %v590, 1.0
    %v592 = vmax.f32 %v591, 0.0
    %593 = vset.pattern.permute.xlu0 2
    %594 = vperm.xlu0 %593, %v503
    %v595 = vpop.permute.xlu0 %594
    %v597 = vlaneseq
    %v598 = vshrl.u32 %v597, 7
    %v599 = vsub.s32 2, %v598
    %v600 = vrot.slane %v504, %v599
    %v601 = vmul.f32 %v595, %v600
    %v602 = vmul.f32 %v592, %v601
    %v603 = vsel %vm479, %v602, 0.0
    %604 = vadd.xlane.f32.xlu0 %v603
    %v605 = vpop.xlane.xlu0 %604
    %v606 = vrot.slane %v605, 4
    %v607 = vadd.f32 %v605, %v606
    %v608 = vrot.slane %v607, 2
    %v609 = vadd.f32 %v607, %v608
    %v610 = vrot.slane %v609, 1
    %v611 = vadd.f32 %v609, %v610
    %v612 = vadd.f32 %v581, %v611
    %613 = vset.pattern.permute.xlu0 3
    %614 = vperm.xlu0 %613, %v492
    %v615 = vpop.permute.xlu0 %614
    %v617 = vlaneseq
    %v618 = vshrl.u32 %v617, 7
    %v619 = vsub.s32 3, %v618
    %v620 = vrot.slane %v492, %v619
    %v621 = vsub.f32 %v615, %v620
    %v622 = vadd.f32 %v621, 1.0
    %v623 = vmax.f32 %v622, 0.0
    %624 = vset.pattern.permute.xlu0 3
    %625 = vperm.xlu0 %624, %v503
    %v626 = vpop.permute.xlu0 %625
    %v628 = vlaneseq
    %v629 = vshrl.u32 %v628, 7
    %v630 = vsub.s32 3, %v629
    %v631 = vrot.slane %v504, %v630
    %v632 = vmul.f32 %v626, %v631
    %v633 = vmul.f32 %v623, %v632
    %v634 = vsel %vm479, %v633, 0.0
    %635 = vadd.xlane.f32.xlu0 %v634
    %v636 = vpop.xlane.xlu0 %635
    %v637 = vrot.slane %v636, 4
    %v638 = vadd.f32 %v636, %v637
    %v639 = vrot.slane %v638, 2
    %v640 = vadd.f32 %v638, %v639
    %v641 = vrot.slane %v640, 1
    %v642 = vadd.f32 %v640, %v641
    %v643 = vadd.f32 %v612, %v642
    %644 = vset.pattern.permute.xlu0 4
    %645 = vperm.xlu0 %644, %v492
    %v646 = vpop.permute.xlu0 %645
    %v648 = vlaneseq
    %v649 = vshrl.u32 %v648, 7
    %v650 = vsub.s32 4, %v649
    %v651 = vrot.slane %v492, %v650
    %v652 = vsub.f32 %v646, %v651
    %v653 = vadd.f32 %v652, 1.0
    %v654 = vmax.f32 %v653, 0.0
    %655 = vset.pattern.permute.xlu0 4
    %656 = vperm.xlu0 %655, %v503
    %v657 = vpop.permute.xlu0 %656
    %v659 = vlaneseq
    %v660 = vshrl.u32 %v659, 7
    %v661 = vsub.s32 4, %v660
    %v662 = vrot.slane %v504, %v661
    %v663 = vmul.f32 %v657, %v662
    %v664 = vmul.f32 %v654, %v663
    %v665 = vsel %vm479, %v664, 0.0
    %666 = vadd.xlane.f32.xlu0 %v665
    %v667 = vpop.xlane.xlu0 %666
    %v668 = vrot.slane %v667, 4
    %v669 = vadd.f32 %v667, %v668
    %v670 = vrot.slane %v669, 2
    %v671 = vadd.f32 %v669, %v670
    %v672 = vrot.slane %v671, 1
    %v673 = vadd.f32 %v671, %v672
    %v674 = vadd.f32 %v643, %v673
    %675 = vset.pattern.permute.xlu0 5
    %676 = vperm.xlu0 %675, %v492
    %v677 = vpop.permute.xlu0 %676
    %v679 = vlaneseq
    %v680 = vshrl.u32 %v679, 7
    %v681 = vsub.s32 5, %v680
    %v682 = vrot.slane %v492, %v681
    %v683 = vsub.f32 %v677, %v682
    %v684 = vadd.f32 %v683, 1.0
    %v685 = vmax.f32 %v684, 0.0
    %686 = vset.pattern.permute.xlu0 5
    %687 = vperm.xlu0 %686, %v503
    %v688 = vpop.permute.xlu0 %687
    %v690 = vlaneseq
    %v691 = vshrl.u32 %v690, 7
    %v692 = vsub.s32 5, %v691
    %v693 = vrot.slane %v504, %v692
    %v694 = vmul.f32 %v688, %v693
    %v695 = vmul.f32 %v685, %v694
    %v696 = vsel %vm479, %v695, 0.0
    %697 = vadd.xlane.f32.xlu0 %v696
    %v698 = vpop.xlane.xlu0 %697
    %v699 = vrot.slane %v698, 4
    %v700 = vadd.f32 %v698, %v699
    %v701 = vrot.slane %v700, 2
    %v702 = vadd.f32 %v700, %v701
    %v703 = vrot.slane %v702, 1
    %v704 = vadd.f32 %v702, %v703
    %v705 = vadd.f32 %v674, %v704
    %706 = vset.pattern.permute.xlu0 6
    %707 = vperm.xlu0 %706, %v492
    %v708 = vpop.permute.xlu0 %707
    %v710 = vlaneseq
    %v711 = vshrl.u32 %v710, 7
    %v712 = vsub.s32 6, %v711
    %v713 = vrot.slane %v492, %v712
    %v714 = vsub.f32 %v708, %v713
    %v715 = vadd.f32 %v714, 1.0
    %v716 = vmax.f32 %v715, 0.0
    %717 = vset.pattern.permute.xlu0 6
    %718 = vperm.xlu0 %717, %v503
    %v719 = vpop.permute.xlu0 %718
    %v721 = vlaneseq
    %v722 = vshrl.u32 %v721, 7
    %v723 = vsub.s32 6, %v722
    %v724 = vrot.slane %v504, %v723
    %v725 = vmul.f32 %v719, %v724
    %v726 = vmul.f32 %v716, %v725
    %v727 = vsel %vm479, %v726, 0.0
    %728 = vadd.xlane.f32.xlu0 %v727
    %v729 = vpop.xlane.xlu0 %728
    %v730 = vrot.slane %v729, 4
    %v731 = vadd.f32 %v729, %v730
    %v732 = vrot.slane %v731, 2
    %v733 = vadd.f32 %v731, %v732
    %v734 = vrot.slane %v733, 1
    %v735 = vadd.f32 %v733, %v734
    %v736 = vadd.f32 %v705, %v735
    %737 = vset.pattern.permute.xlu0 7
    %738 = vperm.xlu0 %737, %v492
    %v739 = vpop.permute.xlu0 %738
    %v741 = vlaneseq
    %v742 = vshrl.u32 %v741, 7
    %v743 = vsub.s32 7, %v742
    %v744 = vrot.slane %v492, %v743
    %v745 = vsub.f32 %v739, %v744
    %v746 = vadd.f32 %v745, 1.0
    %v747 = vmax.f32 %v746, 0.0
    %748 = vset.pattern.permute.xlu0 7
    %749 = vperm.xlu0 %748, %v503
    %v750 = vpop.permute.xlu0 %749
    %v752 = vlaneseq
    %v753 = vshrl.u32 %v752, 7
    %v754 = vsub.s32 7, %v753
    %v755 = vrot.slane %v504, %v754
    %v756 = vmul.f32 %v750, %v755
    %v757 = vmul.f32 %v747, %v756
    %v758 = vsel %vm479, %v757, 0.0
    %759 = vadd.xlane.f32.xlu0 %v758
    %v760 = vpop.xlane.xlu0 %759
    %v761 = vrot.slane %v760, 4
    %v762 = vadd.f32 %v760, %v761
    %v763 = vrot.slane %v762, 2
    %v764 = vadd.f32 %v762, %v763
    %v765 = vrot.slane %v764, 1
    %v766 = vadd.f32 %v764, %v765
    %v767 = vadd.f32 %v736, %v766
    %v768 = vrcp.pop %v517
    %v769 = vmul.f32 %v767, %v768
    %vm770 = vcmask 0
    %771 = vst.msk [vmem:[#allocation2] sm:$0x1] %vm770, %v769
    %772 = vst.msk [vmem:[#allocation4] sm:$0x1] %vm770, %v517
    // Predicated region
    $region14: #{tpu_custom_call.1} parent=1 // pred_check
      _
    $region15: #{tpu_custom_call.1} parent=1 // pred_check_branch
      %774 = sbr.rel (0) target = $region17
    $region16: #{tpu_custom_call.1} parent=1 // pred_region
      %s776 = ssub.s32 16, 16
      %777 = vsyncadd [#allocation3], %s776
      %s779 = sshll.u32 [#allocation2], 4
      %s780 = int_to_ptr.vmem [resolvable:$true] %s779
      %782 = dma.vmem_to_hbm [thread:$0]  %s780, 16, %s3, [#allocation3]
    $region17: #{tpu_custom_call.1} parent=1 // pred_fallthru
      _
    // Predicated region
    $region18: #{tpu_custom_call.1} parent=1 // pred_check
      _
    $region19: #{tpu_custom_call.1} parent=1 // pred_check_branch
      %784 = sbr.rel (0) target = $region21
    $region20: #{tpu_custom_call.1} parent=1 // pred_region
      %s786 = ssub.s32 16, 16
      %787 = vsyncadd [#allocation5], %s786
      %s789 = sshll.u32 [#allocation4], 4
      %s790 = int_to_ptr.vmem [resolvable:$true] %s789
      %792 = dma.vmem_to_hbm [thread:$0]  %s790, 16, %s4, [#allocation5]
    $region21: #{tpu_custom_call.1} parent=1 // pred_fallthru
      _
    // Predicated region
    $region22: #{tpu_custom_call.1} parent=1 // pred_check
      _
    $region23: #{tpu_custom_call.1} parent=1 // pred_check_branch
      %794 = sbr.rel (0) target = $region25
    $region24: #{tpu_custom_call.1} parent=1 // pred_region
      %795 = dma.done [#allocation3], 16
    $region25: #{tpu_custom_call.1} parent=1 // pred_fallthru
      _
    // Predicated region
    $region26: #{tpu_custom_call.1} parent=1 // pred_check
      _
    $region27: #{tpu_custom_call.1} parent=1 // pred_check_branch
      %797 = sbr.rel (0) target = $region29
    $region28: #{tpu_custom_call.1} parent=1 // pred_region
      %798 = dma.done [#allocation5], 16
    $region29: #{tpu_custom_call.1} parent=1 // pred_fallthru
      _
    %799 = vsyncpa [#allocation3], 1
    %800 = vsyncpa [#allocation5], 1

</llo_original>
